<compile_context>
chip_gen: v7x
topology: tpu7x:2x2x1
jax: 0.10.0
libtpu: 0.0.40
codegen_flags: <defaults>
</compile_context>

<pallas_src>
import jax
import jax.numpy as jnp
from jax.experimental import pallas as pl
from jax.experimental.pallas import tpu as pltpu


def _embed_kernel(ids_ref, tok_ref, pos_ref, out_ref):
    # ids_ref: (TS, 1) int32   token ids for this (seq-tile, batch) slab
    # tok_ref: (V, D)          full token-embedding table, VMEM-resident
    # pos_ref: (TS, D)         positional rows for this seq-tile
    # out_ref: (TS, D)
    ts = ids_ref.shape[0]
    v = tok_ref.shape[0]

    # In-kernel clamp (matches a defined gather for any input; hidden under DMA/MXU).
    ids = jnp.clip(ids_ref[...], 0, v - 1)                       # (TS, 1)
    vocab_iota = jax.lax.broadcasted_iota(jnp.int32, (ts, v), 1)
    one_hot = (ids == vocab_iota).astype(tok_ref.dtype)          # (TS, V)

    # Gather via MXU: each one-hot row selects exactly one table row.
    # HIGHEST keeps the f32 table values bit-exact through the matmul (negligible
    # cost at this vocab size; drop to HIGH / bf16+DEFAULT for large V if ~1e-5
    # relative error is acceptable).
    tok_emb = jnp.dot(
        one_hot,
        tok_ref[...],
        preferred_element_type=jnp.float32,
        precision=jax.lax.Precision.HIGHEST,
    )                                                            # (TS, D)

    out_ref[...] = (tok_emb + pos_ref[...]).astype(out_ref.dtype)


def _choose_seq_tile(S, B):
    # Largest multiple-of-8 divisor of S (capped at 512) -> lane/sublane-aligned
    # blocks and a small grid.
    ts = None
    for cand in (512, 256, 128, 64, 32, 16, 8):
        if S % cand == 0:
            ts = cand
            break
    if ts is None:
        raise ValueError(f"sequence length {S} must be a multiple of 8")
    # Guarantee >= 2 grid steps when possible so both v7x TensorCores get work
    # (neutral on v5e/v6e which have a single TC).
    if B * (S // ts) < 2 and ts > 8:
        ts //= 2
    return ts


def custom_embedding(x, tok_table, pos_table):
    """x: (B, S) int token ids -> (B, S, D) = tok_table[x] + pos_table[arange(S)]"""
    B, S = x.shape
    V, D = tok_table.shape
    P, Dp = pos_table.shape
    assert D == Dp and S <= P

    TS = _choose_seq_tile(S, B)
    n_seq_tiles = S // TS
    # seq-tile OUTER, batch INNER -> pos block index constant across the inner
    # axis, so the pos DMA is issued once per seq-tile instead of once per step.
    grid = (n_seq_tiles, B)

    # Flatten to (B*S, 1); the kernel clamps, so no wrapper-side clip pass.
    ids = x.reshape(B * S, 1).astype(jnp.int32)

    grid_spec = pltpu.PrefetchScalarGridSpec(
        num_scalar_prefetch=0,
        grid=grid,
        in_specs=[
            # token ids slab for this (seq-tile, batch)
            pl.BlockSpec((TS, 1), lambda s, b: (b * n_seq_tiles + s, 0)),
            # full token table, resident in VMEM (constant block index => DMA'd once)
            pl.BlockSpec((V, D), lambda s, b: (0, 0)),
            # positional rows for this seq-tile (constant across inner batch axis)
            pl.BlockSpec((TS, D), lambda s, b: (s, 0)),
        ],
        out_specs=pl.BlockSpec((TS, D), lambda s, b: (b * n_seq_tiles + s, 0)),
    )

    # Explicit VMEM budget: double-buffered table + pos + ids + out, plus the
    # (TS, V) one-hot intermediate, plus slack.
    vmem_bytes = (
        2 * V * D * 4          # token table (double-buffered by BlockSpec)
        + 2 * TS * D * 4       # pos tile
        + 2 * TS * 1 * 4       # ids tile
        + 2 * TS * D * 4       # out tile
        + TS * V * 4           # one-hot intermediate
        + (2 << 20)            # slack for compiler temporaries
    )
    vmem_bytes = max(int(vmem_bytes), 4 << 20)

    cost = pl.CostEstimate(
        flops=2 * B * S * V * D + B * S * D,
        transcendentals=0,
        bytes_accessed=(B * S * 4          # ids
                        + V * D * 4        # token table (read once)
                        + S * D * 4        # pos rows (read once per seq-tile)
                        + B * S * D * 4),  # output
    )

    out_flat = pl.pallas_call(
        _embed_kernel,
        out_shape=jax.ShapeDtypeStruct((B * S, D), tok_table.dtype),
        grid_spec=grid_spec,
        compiler_params=pltpu.CompilerParams(
            dimension_semantics=("parallel", "parallel"),
            vmem_limit_bytes=vmem_bytes,
        ),
        cost_estimate=cost,
    )(ids, tok_table, pos_table)

    return out_flat.reshape(B, S, D)


if __name__ == "__main__":
    vocab_size = 100
    embedding_dim = 128   # lane-aligned
    max_positions = 512
    B, S = 2, 8

    key = jax.random.PRNGKey(0)
    k_tok, k_pos, k_x = jax.random.split(key, 3)

    # nn.Embedding default init: N(0, 1)
    tok_table = jax.random.normal(k_tok, (vocab_size, embedding_dim), dtype=jnp.float32)
    pos_table = jax.random.normal(k_pos, (max_positions, embedding_dim), dtype=jnp.float32)

    x = jax.random.randint(k_x, (B, S), 0, vocab_size, dtype=jnp.int32)

    out = custom_embedding(x, tok_table, pos_table)
    out = jax.block_until_ready(out)

    # pure-JAX reference for correctness
    ref = tok_table[x] + pos_table[jnp.arange(S)][None, :, :]
    assert out.shape == (B, S, embedding_dim)
    assert jnp.allclose(out, ref, atol=1e-5), "mismatch vs reference"

    print("KERNEL_OK")
</pallas_src>

<mosaic_0001>
module attributes {stable_mosaic.version = 11 : i64} {
  func.func @_embed_kernel(%arg0: i32, %arg1: i32, %arg2: memref<8x1xi32, #tpu.memory_space<vmem>>, %arg3: memref<100x128xf32, #tpu.memory_space<vmem>>, %arg4: memref<8x128xf32, #tpu.memory_space<vmem>>, %arg5: memref<8x128xf32, #tpu.memory_space<vmem>>) attributes {dimension_semantics = [#tpu.dimension_semantics<parallel>, #tpu.dimension_semantics<parallel>], iteration_bounds = array<i64: 1, 2>, scalar_prefetch = 0 : i64, scratch_operands = 0 : i64, tpu.core_type = #tpu.core_type<tc>, window_params = [{transform_indices = @transform_0, window_bounds = array<i64: 8, 1>}, {pipeline_mode = #tpu.pipeline_mode<synchronous>, transform_indices = @transform_1, window_bounds = array<i64: 100, 128>}, {transform_indices = @transform_2, window_bounds = array<i64: 8, 128>}, {transform_indices = @transform_3, window_bounds = array<i64: 8, 128>}]} {
    %c0 = arith.constant 0 : index
    %c0_0 = arith.constant 0 : index
    %0 = vector.load %arg2[%c0, %c0_0] : memref<8x1xi32, #tpu.memory_space<vmem>>, vector<8x1xi32>
    %c0_i32 = arith.constant 0 : i32
    %c99_i32 = arith.constant 99 : i32
    %1 = vector.broadcast %c0_i32 : i32 to vector<8x1xi32>
    %2 = arith.maxsi %1, %0 : vector<8x1xi32>
    %3 = vector.broadcast %c99_i32 : i32 to vector<8x1xi32>
    %4 = arith.minsi %3, %2 : vector<8x1xi32>
    %5 = tpu.iota {dimensions = array<i32: 1>} : vector<8x100xi32>
    %6 = vector.broadcast %4 : vector<8x1xi32> to vector<8x100xi32>
    %7 = arith.cmpi eq, %6, %5 : vector<8x100xi32>
    %8 = arith.extui %7 : vector<8x100xi1> to vector<8x100xi32>
    %9 = arith.sitofp %8 : vector<8x100xi32> to vector<8x100xf32>
    %c0_1 = arith.constant 0 : index
    %c0_2 = arith.constant 0 : index
    %10 = vector.load %arg3[%c0_1, %c0_2] : memref<100x128xf32, #tpu.memory_space<vmem>>, vector<100x128xf32>
    %cst = arith.constant dense<0.000000e+00> : vector<8x128xf32>
    %11 = tpu.matmul %9, %10, %cst {dimension_numbers = #tpu.dot_dimension_numbers<[1], [0], [0], [1], [0, 0, 1, 1], [], []>, precision = #tpu.contract_precision<fp32>} : vector<8x100xf32>, vector<100x128xf32>, vector<8x128xf32> -> vector<8x128xf32>
    %c0_3 = arith.constant 0 : index
    %c0_4 = arith.constant 0 : index
    %12 = vector.load %arg4[%c0_3, %c0_4] : memref<8x128xf32, #tpu.memory_space<vmem>>, vector<8x128xf32>
    %13 = arith.addf %11, %12 : vector<8x128xf32>
    %c0_5 = arith.constant 0 : index
    %c0_6 = arith.constant 0 : index
    %14 = vector.load %arg5[%c0_5, %c0_6] : memref<8x128xf32, #tpu.memory_space<vmem>>, vector<8x128xf32>
    tpu.vector_store %arg5[%c0_5, %c0_6], %13 {strides = array<i32>} : memref<8x128xf32, #tpu.memory_space<vmem>>, vector<8x128xf32>,
    return
  }
  func.func @transform_0(%arg0: i32, %arg1: i32) -> (i32, i32) {
    %c1_i32 = arith.constant 1 : i32
    %0 = arith.muli %arg1, %c1_i32 : i32
    %1 = arith.addi %0, %arg0 : i32
    %c0_i32 = arith.constant 0 : i32
    %c0_i32_0 = arith.constant 0 : i32
    return %1, %c0_i32 : i32, i32
  }
  func.func @transform_1(%arg0: i32, %arg1: i32) -> (i32, i32) {
    %c0_i32 = arith.constant 0 : i32
    %c0_i32_0 = arith.constant 0 : i32
    %c0_i32_1 = arith.constant 0 : i32
    return %c0_i32, %c0_i32_0 : i32, i32
  }
  func.func @transform_2(%arg0: i32, %arg1: i32) -> (i32, i32) {
    %c0_i32 = arith.constant 0 : i32
    %c0_i32_0 = arith.constant 0 : i32
    return %arg0, %c0_i32 : i32, i32
  }
  func.func @transform_3(%arg0: i32, %arg1: i32) -> (i32, i32) {
    %c1_i32 = arith.constant 1 : i32
    %0 = arith.muli %arg1, %c1_i32 : i32
    %1 = arith.addi %0, %arg0 : i32
    %c0_i32 = arith.constant 0 : i32
    %c0_i32_0 = arith.constant 0 : i32
    return %1, %c0_i32 : i32, i32
  }
}

</mosaic_0001>

<llo_original>
// kernel: tpu_custom_call.1
$region0: #{tpu_custom_call.1}
  #allocation0 [shape = 'u32[]', space=smem, size = 0x4, offset = 0x4, fixed_abs, tag = 'smem constant byte address 0x4 - core index']
  #allocation1 [shape = 'u32[144,128]{1,0:T(1,128)}', space=vmem, size = 0x12000, scoped, tag = 'internal scratch']
  %s0 = inlined_call_operand.vmem [shape: s32[16,1], index: 0, kind: input, shape index: {}]
  %s1 = inlined_call_operand.hbm [shape: f32[100,128], index: 1, kind: input, shape index: {}]
  %s2 = inlined_call_operand.hbm [shape: f32[512,128], index: 2, kind: input, shape index: {}]
  %s3 = inlined_call_operand.hbm [shape: f32[16,128], index: 3, kind: output, shape index: {}]
  %s4 = sld [smem:[#allocation0]]
  $region53: #{tpu_custom_call.1} parent=0
    _
  %s6 = ssub.s32 1, %s4
  %s7 = scalar_select 0, %s6, %s4
  $region1: #{tpu_custom_call.1} parent=0
    #allocation2 [shape = 'u8[53248]{0}', space=vmem, size = 0xd000, scoped, tag = 'input window, operand 1, single buffered']
    #allocation3 [shape = 's32[2]{0}', space=sflag, size = 0x8, scoped, tag = 'scoped memory for tpu_custom_call.1']
    #allocation4 [shape = 's32[2]{0}', space=sflag, size = 0x8, scoped, tag = 'scoped memory for tpu_custom_call.1']
    #allocation5 [shape = 'u8[4096]{0}', space=vmem, size = 0x1000, scoped, tag = 'input window, operand 2, single buffered']
    #allocation6 [shape = 's32[1]{0}', space=sflag, size = 0x4, scoped, tag = 'scoped memory for tpu_custom_call.1']
    #allocation7 [shape = 'u8[8192]{0}', space=vmem, size = 0x2000, scoped, tag = 'output window, operand 0']
    %8 = vsyncpa [#allocation3], 0
    %9 = vsyncpa [#allocation6], 0
    %10 = vsyncpa [#allocation4], 0
    %s11 = scalar_lea.sflag [#allocation4], 1
    %12 = vsyncpa %s11, 0
    loop: start=0, step=1, limit=4
    $region2: #{tpu_custom_call.1} parent=1 // loop_pre_header
      _
    $region3: #{tpu_custom_call.1} parent=1 // loop_header
      %s14 = sphi 0, %s18
      %p15 = scmp.ge.s32.totalorder %s14, 4
      %s21 = sphi 0, %s33
      %s22 = sphi 0, %s29
      %s23 = sphi 0, %s21
      %s24 = sphi 0, %s22
      %s25 = sphi 0, %s23
      %s26 = sphi 0, %s24
      %s38 = sphi 0, %s40
      %s41 = sphi 0, %s38
      %s42 = sphi 0, %s41
      %s58 = sphi 0, %s42
      %s62 = sphi 0, %s62
      %s64 = sphi 0, %s62
      %s65 = sphi 0, %s64
      %s79 = sphi 0, %s65
      %s85 = sphi 0, %s87
      %s88 = sphi 0, %s85
      %s89 = sphi 0, %s88
      %s105 = sphi 0, %s89
      %s113 = sphi 0, %s115
      %s116 = sphi 0, %s113
      %s117 = sphi 0, %s116
      %s133 = sphi 0, %s117
    $region4: #{tpu_custom_call.1} parent=1 // loop_header_branch
      %17 = sbr.rel (%p15) target = $region8
    $region5: #{tpu_custom_call.1} parent=1 // loop_body
      %s19 = ssub.s32 %s14, 1
      %s20 = ssub.s32 %s14, 2
      %s27 = sadd.s32 1, %s22
      %p28 = scmp.ge.s32.totalorder %s27, 2
      %s29 = scalar_select %p28, 0, %s27
      %s30 = sadd.s32 1, %s21
      %s31 = scalar_select %p28, %s30, %s21
      %p32 = scmp.ge.s32.totalorder %s31, 1
      %s33 = scalar_select %p32, 0, %s31
      %s34 = sadd.s32 %s22, %s21
      %s35 = sadd.s32 %s29, %s33
      %s36 = ssub.s32 %s34, %s35
      %p37 = scmp.eq.s32.totalorder %s36, 0
      %s39 = sadd.s32 %s38, 1
      %s40 = scalar_select %p37, %s38, %s39
      %p43 = pneg %p37
      %p44 = scmp.eq.s32.totalorder %s14, 1
      %p45 = por %p43, %p44
      %p46 = scmp.ne.s32.totalorder %s38, %s41
      %p47 = scmp.eq.s32.totalorder %s14, 0
      %p48 = por %p46, %p47
      %p49 = scmp.ne.s32.totalorder %s38, %s41
      %p50 = scmp.eq.s32.totalorder %s19, 1
      %p51 = por %p49, %p50
      %p52 = scmp.ne.s32.totalorder %s41, %s42
      %p53 = scmp.eq.s32.totalorder %s19, 0
      %p54 = por %p52, %p53
      %p55 = scmp.ne.s32.totalorder %s41, %s42
      %p56 = scmp.eq.s32.totalorder %s20, 1
      %p57 = por %p55, %p56
      %p59 = scmp.ne.s32.totalorder %s42, %s58
      %p60 = scmp.eq.s32.totalorder %s20, 0
      %p61 = por %p59, %p60
      %s63 = sadd.s32 %s62, 1
      %p66 = scmp.eq.s32.totalorder %s14, 1
      %p67 = scmp.ne.s32.totalorder %s62, %s64
      %p68 = scmp.eq.s32.totalorder %s14, 0
      %p69 = por %p67, %p68
      %p70 = scmp.ne.s32.totalorder %s62, %s64
      %p71 = scmp.eq.s32.totalorder %s19, 1
      %p72 = por %p70, %p71
      %p73 = scmp.ne.s32.totalorder %s64, %s65
      %p74 = scmp.eq.s32.totalorder %s19, 0
      %p75 = por %p73, %p74
      %p76 = scmp.ne.s32.totalorder %s64, %s65
      %p77 = scmp.eq.s32.totalorder %s20, 1
      %p78 = por %p76, %p77
      %p80 = scmp.ne.s32.totalorder %s65, %s79
      %p81 = scmp.eq.s32.totalorder %s20, 0
      %p82 = por %p80, %p81
      %s83 = ssub.s32 %s21, %s33
      %p84 = scmp.eq.s32.totalorder %s83, 0
      %s86 = sadd.s32 %s85, 1
      %s87 = scalar_select %p84, %s85, %s86
      %p90 = pneg %p84
      %p91 = scmp.eq.s32.totalorder %s14, 1
      %p92 = por %p90, %p91
      %p93 = scmp.ne.s32.totalorder %s85, %s88
      %p94 = scmp.eq.s32.totalorder %s14, 0
      %p95 = por %p93, %p94
      %p96 = scmp.ne.s32.totalorder %s85, %s88
      %p97 = scmp.eq.s32.totalorder %s19, 1
      %p98 = por %p96, %p97
      %p99 = scmp.ne.s32.totalorder %s88, %s89
      %p100 = scmp.eq.s32.totalorder %s19, 0
      %p101 = por %p99, %p100
      %p102 = scmp.ne.s32.totalorder %s88, %s89
      %p103 = scmp.eq.s32.totalorder %s20, 1
      %p104 = por %p102, %p103
      %p106 = scmp.ne.s32.totalorder %s89, %s105
      %p107 = scmp.eq.s32.totalorder %s20, 0
      %p108 = por %p106, %p107
      %s109 = sadd.s32 %s22, %s21
      %s110 = sadd.s32 %s29, %s33
      %s111 = ssub.s32 %s109, %s110
      %p112 = scmp.eq.s32.totalorder %s111, 0
      %s114 = sadd.s32 %s113, 1
      %s115 = scalar_select %p112, %s113, %s114
      %p118 = pneg %p112
      %p119 = scmp.eq.s32.totalorder %s14, 1
      %p120 = por %p118, %p119
      %p121 = scmp.ne.s32.totalorder %s113, %s116
      %p122 = scmp.eq.s32.totalorder %s14, 0
      %p123 = por %p121, %p122
      %p124 = scmp.ne.s32.totalorder %s113, %s116
      %p125 = scmp.eq.s32.totalorder %s19, 1
      %p126 = por %p124, %p125
      %p127 = scmp.ne.s32.totalorder %s116, %s117
      %p128 = scmp.eq.s32.totalorder %s19, 0
      %p129 = por %p127, %p128
      %p130 = scmp.ne.s32.totalorder %s116, %s117
      %p131 = scmp.eq.s32.totalorder %s20, 1
      %p132 = por %p130, %p131
      %p134 = scmp.ne.s32.totalorder %s117, %s133
      %p135 = scmp.eq.s32.totalorder %s20, 0
      %p136 = por %p134, %p135
      %p137 = scmp.le.s32.totalorder 1, %s14
      %p138 = scmp.lt.s32.totalorder %s14, 3
      %p139 = pnand %p137, %p138
      %p140 = pneg %p139
      // Predicated region
      $region9: #{tpu_custom_call.1} parent=5 // pred_check
        _
      $region10: #{tpu_custom_call.1} parent=5 // pred_check_branch
        %142 = sbr.rel (%p139) target = $region12
      $region11: #{tpu_custom_call.1} parent=5 // pred_region
        %s143 = ssub.s32 %s14, 1
        // Predicated region
        $region13: #{tpu_custom_call.1} parent=11 // pred_check
          %p144 = pneg %p75
        $region14: #{tpu_custom_call.1} parent=11 // pred_check_branch
          %146 = sbr.rel (%p144) target = $region16
        $region15: #{tpu_custom_call.1} parent=11 // pred_region
          %s148 = ssub.s32 1664, 1664
          %149 = vsyncadd [#allocation3], %s148
          %s150 = sshll.u32 [#allocation2], 4
          %s151 = int_to_ptr.vmem [resolvable:$true] %s150
          %156 = dma.hbm_to_vmem [thread:$0]  %s1, 1664, %s151, [#allocation3], 128, 128, 8
        $region16: #{tpu_custom_call.1} parent=11 // pred_fallthru
          _
        // Predicated region
        $region17: #{tpu_custom_call.1} parent=11 // pred_check
          %p157 = pneg %p101
        $region18: #{tpu_custom_call.1} parent=11 // pred_check_branch
          %159 = sbr.rel (%p157) target = $region20
        $region19: #{tpu_custom_call.1} parent=11 // pred_region
          %s161 = ssub.s32 128, 128
          %162 = vsyncadd [#allocation6], %s161
          %s163 = smul.addr %s23, 128
          %s164 = scalar_lea.hbm %s2, %s163
          %s166 = sshll.u32 [#allocation5], 4
          %s167 = int_to_ptr.vmem [resolvable:$true] %s166
          %169 = dma.hbm_to_vmem [thread:$0]  %s164, 128, %s167, [#allocation6]
        $region20: #{tpu_custom_call.1} parent=11 // pred_fallthru
          _
      $region12: #{tpu_custom_call.1} parent=5 // pred_fallthru
        _
      %p170 = scmp.lt.s32.totalorder %s14, 2
      // Predicated region
      $region21: #{tpu_custom_call.1} parent=5 // pred_check
        %p171 = pneg %p170
      $region22: #{tpu_custom_call.1} parent=5 // pred_check_branch
        %173 = sbr.rel (%p171) target = $region24
      $region23: #{tpu_custom_call.1} parent=5 // pred_region
        // Predicated region
        $region25: #{tpu_custom_call.1} parent=23 // pred_check
          %p174 = pneg %p48
        $region26: #{tpu_custom_call.1} parent=23 // pred_check_branch
          %176 = sbr.rel (%p174) target = $region28
        $region27: #{tpu_custom_call.1} parent=23 // pred_region
          %s177 = sadd.s32 %s22, %s21
          %p178 = scmp.lt.s32.totalorder %s177, 1
          %s179 = scalar_select %p178, %s177, 1
          %s180 = smul.addr %s179, 8
          %s181 = scalar_lea.vmem %s0, %s180
          %s182 = sadd.s32 %s22, %s21
        $region28: #{tpu_custom_call.1} parent=23 // pred_fallthru
          _
      $region24: #{tpu_custom_call.1} parent=5 // pred_fallthru
        _
      %p183 = scmp.le.s32.totalorder 1, %s14
      %p184 = scmp.lt.s32.totalorder %s14, 3
      %p185 = pnand %p183, %p184
      %p186 = pneg %p185
      // Predicated region
      $region29: #{tpu_custom_call.1} parent=5 // pred_check
        _
      $region30: #{tpu_custom_call.1} parent=5 // pred_check_branch
        %188 = sbr.rel (%p185) target = $region32
      $region31: #{tpu_custom_call.1} parent=5 // pred_region
        %s189 = ssub.s32 %s14, 1
        // Predicated region
        $region33: #{tpu_custom_call.1} parent=31 // pred_check
          %p190 = pneg %p75
        $region34: #{tpu_custom_call.1} parent=31 // pred_check_branch
          %192 = sbr.rel (%p190) target = $region36
        $region35: #{tpu_custom_call.1} parent=31 // pred_region
          %193 = dma.done [#allocation3], 1664
        $region36: #{tpu_custom_call.1} parent=31 // pred_fallthru
          _
        // Predicated region
        $region37: #{tpu_custom_call.1} parent=31 // pred_check
          %p194 = pneg %p101
        $region38: #{tpu_custom_call.1} parent=31 // pred_check_branch
          %196 = sbr.rel (%p194) target = $region40
        $region39: #{tpu_custom_call.1} parent=31 // pred_region
          %197 = dma.done [#allocation6], 128
        $region40: #{tpu_custom_call.1} parent=31 // pred_fallthru
          _
        %s198 = sadd.s32 %s24, %s23
        %p199 = scmp.lt.s32.totalorder %s198, 1
        %s200 = scalar_select %p199, %s198, 1
        %s201 = smul.addr %s200, 8
        %s202 = scalar_lea.vmem %s0, %s201
        %p203 = pneg %p54
        %p204 = pneg %p51
        %p205 = pneg %p75
        %p206 = pneg %p72
        %p207 = pneg %p101
        %p208 = pneg %p98
        %p209 = pneg %p129
        %p210 = pneg %p126
        %s211 = sand.u32 %s116, 1
        %s212 = scalar_lea.sflag [#allocation4], %s211
        %s213 = sand.u32 %s116, 1
        %s214 = smul.addr %s213, 8
        %s215 = scalar_lea.vmem [#allocation7], %s214
        %s216 = sadd.s32 %s24, %s23
        %p217 = scmp.lt.s32.totalorder %s216, 1
        %s218 = scalar_select %p217, %s216, 1
        %s219 = smul.addr %s218, 8
        %s220 = scalar_lea.vmem %s0, %s219
        %s221 = sadd.s32 %s24, %s23
        %s222 = sadd.s32 %s24, %s23
        %v223 = vld [vmem:[%s220] sm:$0xff]
        %vm224 = vcmp.gt.s32.totalorder %v223, 0
        %v225 = vsel %vm224, %v223, 0
        %vm226 = vcmp.lt.s32.totalorder %v225, 99
        %v227 = vsel %vm226, %v225, 99
        %v228 = vlaneseq
        %v229 = vand.u32 %v228, 127
        %230 = vset.pattern.permute.xlu0 0
        %231 = vperm.xlu0 %230, %v227
        %v232 = vpop.permute.xlu0 %231
        %vm233 = vcmp.eq.s32.totalorder %v232, %v229
        %v234 = vsel %vm233, 1, 0
        %v235 = vcvt.s32.f32 %v234
        %v236 = vld [vmem:[#allocation2] sm:$0xff]
        %v237 = vld [vmem:[#allocation2 + $0x8] sm:$0xff]
        %v238 = vld [vmem:[#allocation2 + $0x10] sm:$0xff]
        %v239 = vld [vmem:[#allocation2 + $0x18] sm:$0xff]
        %v240 = vld [vmem:[#allocation2 + $0x20] sm:$0xff]
        %v241 = vld [vmem:[#allocation2 + $0x28] sm:$0xff]
        %v242 = vld [vmem:[#allocation2 + $0x30] sm:$0xff]
        %v243 = vld [vmem:[#allocation2 + $0x38] sm:$0xff]
        %v244 = vld [vmem:[#allocation2 + $0x40] sm:$0xff]
        %v245 = vld [vmem:[#allocation2 + $0x48] sm:$0xff]
        %v246 = vld [vmem:[#allocation2 + $0x50] sm:$0xff]
        %v247 = vld [vmem:[#allocation2 + $0x58] sm:$0xff]
        %v248 = vld [vmem:[#allocation2 + $0x60] sm:$0xf]
        %v249 = vld [vmem:[#allocation5] sm:$0xff]
        %vm250 = vcmask 818176
        %v252 = vsel %vm250, %v235, 0
        %vm254 = vcmask 1043456
        %v256 = vsel %vm254, %v248, 0
        %258 = vmatprep.subr.mxu0 0.0
        %v259 = vand.u32 %v236, 4294901760
        %260 = vmatpush1.msra.mxu0 %v259
        %261 = vmatprep.subr.mxu0 0.0
        %v262 = vand.u32 %v237, 4294901760
        %263 = vmatpush1.msra.mxu0 %v262
        %264 = vmatprep.subr.mxu0 0.0
        %v265 = vand.u32 %v238, 4294901760
        %266 = vmatpush1.msra.mxu0 %v265
        %267 = vmatprep.subr.mxu0 0.0
        %v268 = vand.u32 %v239, 4294901760
        %269 = vmatpush1.msra.mxu0 %v268
        %270 = vmatprep.subr.mxu0 0.0
        %v271 = vand.u32 %v240, 4294901760
        %272 = vmatpush1.msra.mxu0 %v271
        %273 = vmatprep.subr.mxu0 0.0
        %v274 = vand.u32 %v241, 4294901760
        %275 = vmatpush1.msra.mxu0 %v274
        %276 = vmatprep.subr.mxu0 0.0
        %v277 = vand.u32 %v242, 4294901760
        %278 = vmatpush1.msra.mxu0 %v277
        %279 = vmatprep.subr.mxu0 0.0
        %v280 = vand.u32 %v243, 4294901760
        %281 = vmatpush1.msra.mxu0 %v280
        %282 = vmatprep.subr.mxu0 0.0
        %v283 = vand.u32 %v244, 4294901760
        %284 = vmatpush1.msra.mxu0 %v283
        %285 = vmatprep.subr.mxu0 0.0
        %v286 = vand.u32 %v245, 4294901760
        %287 = vmatpush1.msra.mxu0 %v286
        %288 = vmatprep.subr.mxu0 0.0
        %v289 = vand.u32 %v246, 4294901760
        %290 = vmatpush1.msra.mxu0 %v289
        %291 = vmatprep.subr.mxu0 0.0
        %v292 = vand.u32 %v247, 4294901760
        %293 = vmatpush1.msra.mxu0 %v292
        %294 = vmatprep.subr.mxu0 0.0
        %v295 = vand.u32 %v256, 4294901760
        %296 = vmatpush1.msra.mxu0 %v295
        %297 = vmatprep.subr.mxu0 0.0
        %298 = vmatpush1.msra.mxu0 0.0
        %299 = vmatprep.subr.mxu0 0.0
        %300 = vmatpush1.msra.mxu0 0.0
        %301 = vmatprep.subr.mxu0 0.0
        %302 = vmatpush1.msra.mxu0 0.0
        %303 = vmatprep.subr.mxu0 0.0
        %304 = vmatpush1.msra.mxu0 0.0
        %305 = vmatprep.subr.mxu0 0.0
        %306 = vmatpush1.msra.mxu0 0.0
        %307 = vmatprep.subr.mxu0 0.0
        %308 = vmatpush1.msra.mxu0 0.0
        %309 = vmatprep.subr.mxu0 0.0
        %310 = vmatpush1.msra.mxu0 0.0
        %311 = vmatprep.subr.mxu0 0.0
        %312 = vmatpush1.msra.mxu0 0.0
        %313 = vmatprep.subr.mxu0 0.0
        %314 = vmatpush1.msra.mxu0 0.0
        %315 = vmatprep.subr.mxu0 0.0
        %316 = vmatpush1.msra.mxu0 0.0
        %317 = vmatprep.subr.mxu0 0.0
        %318 = vmatpush1.msra.mxu0 0.0
        %319 = vmatprep.subr.mxu0 0.0
        %320 = vmatpush1.msra.mxu0 0.0
        %321 = vmatprep.subr.mxu0 0.0
        %322 = vmatpush1.msra.mxu0 0.0
        %323 = vmatprep.subr.mxu0 0.0
        %324 = vmatpush1.msra.mxu0 0.0
        %325 = vmatprep.subr.mxu0 0.0
        %326 = vmatpush1.msra.mxu0 0.0
        %327 = vmatprep.subr.mxu0 0.0
        %328 = vmatpush1.msra.mxu0 0.0
        %329 = vmatprep.subr.mxu0 0.0
        %330 = vmatpush1.msra.mxu0 0.0
        %331 = vmatprep.subr.mxu0 0.0
        %332 = vmatpush1.msra.mxu0 0.0
        %333 = vmatprep.subr.mxu0 0.0
        %334 = vmatpush1.msra.mxu0 0.0
        %335 = vmatprep.mubr.f32.mxu0 0.0
        %v336 = vand.u32 %v252, 4294901760
        %v337 = vsub.f32 %v252, %v336
        %v338 = vand.u32 %v337, 4294901760
        %v339 = vsub.f32 %v337, %v338
        %v340 = vand.u32 %v339, 4294901760
        %341 = vmatmul.mubr.f32.gmra.mrb[0].mxu0 %v340
        %v342 = vpop.f32.mrb[0].mxu0
        %v343 = vadd.f32 %v249, %v342
        %v344 = vpop.f32.mrb[0].mxu0
        %345 = vdwg.mxu0
        %346 = vmatprep.subr.mxu0 0.0
        %v347 = vand.u32 %v236, 4294901760
        %v348 = vsub.f32 %v236, %v347
        %v349 = vand.u32 %v348, 4294901760
        %v350 = vsub.f32 %v348, %v349
        %v351 = vand.u32 %v350, 4294901760
        %352 = vmatpush1.msra.mxu0 %v351
        %353 = vmatprep.subr.mxu0 0.0
        %v354 = vand.u32 %v237, 4294901760
        %v355 = vsub.f32 %v237, %v354
        %v356 = vand.u32 %v355, 4294901760
        %v357 = vsub.f32 %v355, %v356
        %v358 = vand.u32 %v357, 4294901760
        %359 = vmatpush1.msra.mxu0 %v358
        %360 = vmatprep.subr.mxu0 0.0
        %v361 = vand.u32 %v238, 4294901760
        %v362 = vsub.f32 %v238, %v361
        %v363 = vand.u32 %v362, 4294901760
        %v364 = vsub.f32 %v362, %v363
        %v365 = vand.u32 %v364, 4294901760
        %366 = vmatpush1.msra.mxu0 %v365
        %367 = vmatprep.subr.mxu0 0.0
        %v368 = vand.u32 %v239, 4294901760
        %v369 = vsub.f32 %v239, %v368
        %v370 = vand.u32 %v369, 4294901760
        %v371 = vsub.f32 %v369, %v370
        %v372 = vand.u32 %v371, 4294901760
        %373 = vmatpush1.msra.mxu0 %v372
        %374 = vmatprep.subr.mxu0 0.0
        %v375 = vand.u32 %v240, 4294901760
        %v376 = vsub.f32 %v240, %v375
        %v377 = vand.u32 %v376, 4294901760
        %v378 = vsub.f32 %v376, %v377
        %v379 = vand.u32 %v378, 4294901760
        %380 = vmatpush1.msra.mxu0 %v379
        %381 = vmatprep.subr.mxu0 0.0
        %v382 = vand.u32 %v241, 4294901760
        %v383 = vsub.f32 %v241, %v382
        %v384 = vand.u32 %v383, 4294901760
        %v385 = vsub.f32 %v383, %v384
        %v386 = vand.u32 %v385, 4294901760
        %387 = vmatpush1.msra.mxu0 %v386
        %388 = vmatprep.subr.mxu0 0.0
        %v389 = vand.u32 %v242, 4294901760
        %v390 = vsub.f32 %v242, %v389
        %v391 = vand.u32 %v390, 4294901760
        %v392 = vsub.f32 %v390, %v391
        %v393 = vand.u32 %v392, 4294901760
        %394 = vmatpush1.msra.mxu0 %v393
        %395 = vmatprep.subr.mxu0 0.0
        %v396 = vand.u32 %v243, 4294901760
        %v397 = vsub.f32 %v243, %v396
        %v398 = vand.u32 %v397, 4294901760
        %v399 = vsub.f32 %v397, %v398
        %v400 = vand.u32 %v399, 4294901760
        %401 = vmatpush1.msra.mxu0 %v400
        %402 = vmatprep.subr.mxu0 0.0
        %v403 = vand.u32 %v244, 4294901760
        %v404 = vsub.f32 %v244, %v403
        %v405 = vand.u32 %v404, 4294901760
        %v406 = vsub.f32 %v404, %v405
        %v407 = vand.u32 %v406, 4294901760
        %408 = vmatpush1.msra.mxu0 %v407
        %409 = vmatprep.subr.mxu0 0.0
        %v410 = vand.u32 %v245, 4294901760
        %v411 = vsub.f32 %v245, %v410
        %v412 = vand.u32 %v411, 4294901760
        %v413 = vsub.f32 %v411, %v412
        %v414 = vand.u32 %v413, 4294901760
        %415 = vmatpush1.msra.mxu0 %v414
        %416 = vmatprep.subr.mxu0 0.0
        %v417 = vand.u32 %v246, 4294901760
        %v418 = vsub.f32 %v246, %v417
        %v419 = vand.u32 %v418, 4294901760
        %v420 = vsub.f32 %v418, %v419
        %v421 = vand.u32 %v420, 4294901760
        %422 = vmatpush1.msra.mxu0 %v421
        %423 = vmatprep.subr.mxu0 0.0
        %v424 = vand.u32 %v247, 4294901760
        %v425 = vsub.f32 %v247, %v424
        %v426 = vand.u32 %v425, 4294901760
        %v427 = vsub.f32 %v425, %v426
        %v428 = vand.u32 %v427, 4294901760
        %429 = vmatpush1.msra.mxu0 %v428
        %430 = vmatprep.subr.mxu0 0.0
        %v431 = vand.u32 %v256, 4294901760
        %v432 = vsub.f32 %v256, %v431
        %v433 = vand.u32 %v432, 4294901760
        %v434 = vsub.f32 %v432, %v433
        %v435 = vand.u32 %v434, 4294901760
        %436 = vmatpush1.msra.mxu0 %v435
        %437 = vmatprep.subr.mxu0 0.0
        %438 = vmatpush1.msra.mxu0 0.0
        %439 = vmatprep.subr.mxu0 0.0
        %440 = vmatpush1.msra.mxu0 0.0
        %441 = vmatprep.subr.mxu0 0.0
        %442 = vmatpush1.msra.mxu0 0.0
        %443 = vmatprep.subr.mxu0 0.0
        %444 = vmatpush1.msra.mxu0 0.0
        %445 = vmatprep.subr.mxu0 0.0
        %446 = vmatpush1.msra.mxu0 0.0
        %447 = vmatprep.subr.mxu0 0.0
        %448 = vmatpush1.msra.mxu0 0.0
        %449 = vmatprep.subr.mxu0 0.0
        %450 = vmatpush1.msra.mxu0 0.0
        %451 = vmatprep.subr.mxu0 0.0
        %452 = vmatpush1.msra.mxu0 0.0
        %453 = vmatprep.subr.mxu0 0.0
        %454 = vmatpush1.msra.mxu0 0.0
        %455 = vmatprep.subr.mxu0 0.0
        %456 = vmatpush1.msra.mxu0 0.0
        %457 = vmatprep.subr.mxu0 0.0
        %458 = vmatpush1.msra.mxu0 0.0
        %459 = vmatprep.subr.mxu0 0.0
        %460 = vmatpush1.msra.mxu0 0.0
        %461 = vmatprep.subr.mxu0 0.0
        %462 = vmatpush1.msra.mxu0 0.0
        %463 = vmatprep.subr.mxu0 0.0
        %464 = vmatpush1.msra.mxu0 0.0
        %465 = vmatprep.subr.mxu0 0.0
        %466 = vmatpush1.msra.mxu0 0.0
        %467 = vmatprep.subr.mxu0 0.0
        %468 = vmatpush1.msra.mxu0 0.0
        %469 = vmatprep.subr.mxu0 0.0
        %470 = vmatpush1.msra.mxu0 0.0
        %471 = vmatprep.subr.mxu0 0.0
        %472 = vmatpush1.msra.mxu0 0.0
        %473 = vmatprep.subr.mxu0 0.0
        %474 = vmatpush1.msra.mxu0 0.0
        %475 = vmatprep.mubr.f32.mxu0 0.0
        %v476 = vand.u32 %v252, 4294901760
        %477 = vmatmul.mubr.f32.gmra.mrb[0].mxu0 %v476
        %v478 = vpop.f32.mrb[0].mxu0
        %v479 = vadd.f32 %v343, %v478
        %v480 = vpop.f32.mrb[0].mxu0
        %481 = vdwg.mxu0
        %482 = vmatprep.subr.mxu0 0.0
        %v483 = vand.u32 %v236, 4294901760
        %v484 = vsub.f32 %v236, %v483
        %485 = vmatpush1.msra.mxu0 %v484
        %486 = vmatprep.subr.mxu0 0.0
        %v487 = vand.u32 %v237, 4294901760
        %v488 = vsub.f32 %v237, %v487
        %489 = vmatpush1.msra.mxu0 %v488
        %490 = vmatprep.subr.mxu0 0.0
        %v491 = vand.u32 %v238, 4294901760
        %v492 = vsub.f32 %v238, %v491
        %493 = vmatpush1.msra.mxu0 %v492
        %494 = vmatprep.subr.mxu0 0.0
        %v495 = vand.u32 %v239, 4294901760
        %v496 = vsub.f32 %v239, %v495
        %497 = vmatpush1.msra.mxu0 %v496
        %498 = vmatprep.subr.mxu0 0.0
        %v499 = vand.u32 %v240, 4294901760
        %v500 = vsub.f32 %v240, %v499
        %501 = vmatpush1.msra.mxu0 %v500
        %502 = vmatprep.subr.mxu0 0.0
        %v503 = vand.u32 %v241, 4294901760
        %v504 = vsub.f32 %v241, %v503
        %505 = vmatpush1.msra.mxu0 %v504
        %506 = vmatprep.subr.mxu0 0.0
        %v507 = vand.u32 %v242, 4294901760
        %v508 = vsub.f32 %v242, %v507
        %509 = vmatpush1.msra.mxu0 %v508
        %510 = vmatprep.subr.mxu0 0.0
        %v511 = vand.u32 %v243, 4294901760
        %v512 = vsub.f32 %v243, %v511
        %513 = vmatpush1.msra.mxu0 %v512
        %514 = vmatprep.subr.mxu0 0.0
        %v515 = vand.u32 %v244, 4294901760
        %v516 = vsub.f32 %v244, %v515
        %517 = vmatpush1.msra.mxu0 %v516
        %518 = vmatprep.subr.mxu0 0.0
        %v519 = vand.u32 %v245, 4294901760
        %v520 = vsub.f32 %v245, %v519
        %521 = vmatpush1.msra.mxu0 %v520
        %522 = vmatprep.subr.mxu0 0.0
        %v523 = vand.u32 %v246, 4294901760
        %v524 = vsub.f32 %v246, %v523
        %525 = vmatpush1.msra.mxu0 %v524
        %526 = vmatprep.subr.mxu0 0.0
        %v527 = vand.u32 %v247, 4294901760
        %v528 = vsub.f32 %v247, %v527
        %529 = vmatpush1.msra.mxu0 %v528
        %530 = vmatprep.subr.mxu0 0.0
        %v531 = vand.u32 %v256, 4294901760
        %v532 = vsub.f32 %v256, %v531
        %533 = vmatpush1.msra.mxu0 %v532
        %534 = vmatprep.subr.mxu0 0.0
        %535 = vmatpush1.msra.mxu0 0.0
        %536 = vmatprep.subr.mxu0 0.0
        %537 = vmatpush1.msra.mxu0 0.0
        %538 = vmatprep.subr.mxu0 0.0
        %539 = vmatpush1.msra.mxu0 0.0
        %540 = vmatprep.subr.mxu0 0.0
        %541 = vmatpush1.msra.mxu0 0.0
        %542 = vmatprep.subr.mxu0 0.0
        %543 = vmatpush1.msra.mxu0 0.0
        %544 = vmatprep.subr.mxu0 0.0
        %545 = vmatpush1.msra.mxu0 0.0
        %546 = vmatprep.subr.mxu0 0.0
        %547 = vmatpush1.msra.mxu0 0.0
        %548 = vmatprep.subr.mxu0 0.0
        %549 = vmatpush1.msra.mxu0 0.0
        %550 = vmatprep.subr.mxu0 0.0
        %551 = vmatpush1.msra.mxu0 0.0
        %552 = vmatprep.subr.mxu0 0.0
        %553 = vmatpush1.msra.mxu0 0.0
        %554 = vmatprep.subr.mxu0 0.0
        %555 = vmatpush1.msra.mxu0 0.0
        %556 = vmatprep.subr.mxu0 0.0
        %557 = vmatpush1.msra.mxu0 0.0
        %558 = vmatprep.subr.mxu0 0.0
        %559 = vmatpush1.msra.mxu0 0.0
        %560 = vmatprep.subr.mxu0 0.0
        %561 = vmatpush1.msra.mxu0 0.0
        %562 = vmatprep.subr.mxu0 0.0
        %563 = vmatpush1.msra.mxu0 0.0
        %564 = vmatprep.subr.mxu0 0.0
        %565 = vmatpush1.msra.mxu0 0.0
        %566 = vmatprep.subr.mxu0 0.0
        %567 = vmatpush1.msra.mxu0 0.0
        %568 = vmatprep.subr.mxu0 0.0
        %569 = vmatpush1.msra.mxu0 0.0
        %570 = vmatprep.subr.mxu0 0.0
        %571 = vmatpush1.msra.mxu0 0.0
        %572 = vmatprep.mubr.f32.mxu0 0.0
        %v573 = vand.u32 %v252, 4294901760
        %v574 = vsub.f32 %v252, %v573
        %575 = vmatmul.mubr.f32.gmra.mrb[0].mxu0 %v574
        %v576 = vpop.f32.mrb[0].mxu0
        %v577 = vadd.f32 %v479, %v576
        %v578 = vpop.f32.mrb[0].mxu0
        %579 = vdwg.mxu0
        %580 = vmatprep.subr.mxu0 0.0
        %v581 = vand.u32 %v236, 4294901760
        %582 = vmatpush1.msra.mxu0 %v581
        %583 = vmatprep.subr.mxu0 0.0
        %v584 = vand.u32 %v237, 4294901760
        %585 = vmatpush1.msra.mxu0 %v584
        %586 = vmatprep.subr.mxu0 0.0
        %v587 = vand.u32 %v238, 4294901760
        %588 = vmatpush1.msra.mxu0 %v587
        %589 = vmatprep.subr.mxu0 0.0
        %v590 = vand.u32 %v239, 4294901760
        %591 = vmatpush1.msra.mxu0 %v590
        %592 = vmatprep.subr.mxu0 0.0
        %v593 = vand.u32 %v240, 4294901760
        %594 = vmatpush1.msra.mxu0 %v593
        %595 = vmatprep.subr.mxu0 0.0
        %v596 = vand.u32 %v241, 4294901760
        %597 = vmatpush1.msra.mxu0 %v596
        %598 = vmatprep.subr.mxu0 0.0
        %v599 = vand.u32 %v242, 4294901760
        %600 = vmatpush1.msra.mxu0 %v599
        %601 = vmatprep.subr.mxu0 0.0
        %v602 = vand.u32 %v243, 4294901760
        %603 = vmatpush1.msra.mxu0 %v602
        %604 = vmatprep.subr.mxu0 0.0
        %v605 = vand.u32 %v244, 4294901760
        %606 = vmatpush1.msra.mxu0 %v605
        %607 = vmatprep.subr.mxu0 0.0
        %v608 = vand.u32 %v245, 4294901760
        %609 = vmatpush1.msra.mxu0 %v608
        %610 = vmatprep.subr.mxu0 0.0
        %v611 = vand.u32 %v246, 4294901760
        %612 = vmatpush1.msra.mxu0 %v611
        %613 = vmatprep.subr.mxu0 0.0
        %v614 = vand.u32 %v247, 4294901760
        %615 = vmatpush1.msra.mxu0 %v614
        %616 = vmatprep.subr.mxu0 0.0
        %v617 = vand.u32 %v256, 4294901760
        %618 = vmatpush1.msra.mxu0 %v617
        %619 = vmatprep.subr.mxu0 0.0
        %620 = vmatpush1.msra.mxu0 0.0
        %621 = vmatprep.subr.mxu0 0.0
        %622 = vmatpush1.msra.mxu0 0.0
        %623 = vmatprep.subr.mxu0 0.0
        %624 = vmatpush1.msra.mxu0 0.0
        %625 = vmatprep.subr.mxu0 0.0
        %626 = vmatpush1.msra.mxu0 0.0
        %627 = vmatprep.subr.mxu0 0.0
        %628 = vmatpush1.msra.mxu0 0.0
        %629 = vmatprep.subr.mxu0 0.0
        %630 = vmatpush1.msra.mxu0 0.0
        %631 = vmatprep.subr.mxu0 0.0
        %632 = vmatpush1.msra.mxu0 0.0
        %633 = vmatprep.subr.mxu0 0.0
        %634 = vmatpush1.msra.mxu0 0.0
        %635 = vmatprep.subr.mxu0 0.0
        %636 = vmatpush1.msra.mxu0 0.0
        %637 = vmatprep.subr.mxu0 0.0
        %638 = vmatpush1.msra.mxu0 0.0
        %639 = vmatprep.subr.mxu0 0.0
        %640 = vmatpush1.msra.mxu0 0.0
        %641 = vmatprep.subr.mxu0 0.0
        %642 = vmatpush1.msra.mxu0 0.0
        %643 = vmatprep.subr.mxu0 0.0
        %644 = vmatpush1.msra.mxu0 0.0
        %645 = vmatprep.subr.mxu0 0.0
        %646 = vmatpush1.msra.mxu0 0.0
        %647 = vmatprep.subr.mxu0 0.0
        %648 = vmatpush1.msra.mxu0 0.0
        %649 = vmatprep.subr.mxu0 0.0
        %650 = vmatpush1.msra.mxu0 0.0
        %651 = vmatprep.subr.mxu0 0.0
        %652 = vmatpush1.msra.mxu0 0.0
        %653 = vmatprep.subr.mxu0 0.0
        %654 = vmatpush1.msra.mxu0 0.0
        %655 = vmatprep.subr.mxu0 0.0
        %656 = vmatpush1.msra.mxu0 0.0
        %657 = vmatprep.mubr.f32.mxu0 0.0
        %v658 = vand.u32 %v252, 4294901760
        %v659 = vsub.f32 %v252, %v658
        %v660 = vand.u32 %v659, 4294901760
        %661 = vmatmul.mubr.f32.gmra.mrb[0].mxu0 %v660
        %v662 = vpop.f32.mrb[0].mxu0
        %v663 = vadd.f32 %v577, %v662
        %v664 = vpop.f32.mrb[0].mxu0
        %665 = vdwg.mxu0
        %666 = vmatprep.subr.mxu0 0.0
        %v667 = vand.u32 %v236, 4294901760
        %v668 = vsub.f32 %v236, %v667
        %v669 = vand.u32 %v668, 4294901760
        %670 = vmatpush1.msra.mxu0 %v669
        %671 = vmatprep.subr.mxu0 0.0
        %v672 = vand.u32 %v237, 4294901760
        %v673 = vsub.f32 %v237, %v672
        %v674 = vand.u32 %v673, 4294901760
        %675 = vmatpush1.msra.mxu0 %v674
        %676 = vmatprep.subr.mxu0 0.0
        %v677 = vand.u32 %v238, 4294901760
        %v678 = vsub.f32 %v238, %v677
        %v679 = vand.u32 %v678, 4294901760
        %680 = vmatpush1.msra.mxu0 %v679
        %681 = vmatprep.subr.mxu0 0.0
        %v682 = vand.u32 %v239, 4294901760
        %v683 = vsub.f32 %v239, %v682
        %v684 = vand.u32 %v683, 4294901760
        %685 = vmatpush1.msra.mxu0 %v684
        %686 = vmatprep.subr.mxu0 0.0
        %v687 = vand.u32 %v240, 4294901760
        %v688 = vsub.f32 %v240, %v687
        %v689 = vand.u32 %v688, 4294901760
        %690 = vmatpush1.msra.mxu0 %v689
        %691 = vmatprep.subr.mxu0 0.0
        %v692 = vand.u32 %v241, 4294901760
        %v693 = vsub.f32 %v241, %v692
        %v694 = vand.u32 %v693, 4294901760
        %695 = vmatpush1.msra.mxu0 %v694
        %696 = vmatprep.subr.mxu0 0.0
        %v697 = vand.u32 %v242, 4294901760
        %v698 = vsub.f32 %v242, %v697
        %v699 = vand.u32 %v698, 4294901760
        %700 = vmatpush1.msra.mxu0 %v699
        %701 = vmatprep.subr.mxu0 0.0
        %v702 = vand.u32 %v243, 4294901760
        %v703 = vsub.f32 %v243, %v702
        %v704 = vand.u32 %v703, 4294901760
        %705 = vmatpush1.msra.mxu0 %v704
        %706 = vmatprep.subr.mxu0 0.0
        %v707 = vand.u32 %v244, 4294901760
        %v708 = vsub.f32 %v244, %v707
        %v709 = vand.u32 %v708, 4294901760
        %710 = vmatpush1.msra.mxu0 %v709
        %711 = vmatprep.subr.mxu0 0.0
        %v712 = vand.u32 %v245, 4294901760
        %v713 = vsub.f32 %v245, %v712
        %v714 = vand.u32 %v713, 4294901760
        %715 = vmatpush1.msra.mxu0 %v714
        %716 = vmatprep.subr.mxu0 0.0
        %v717 = vand.u32 %v246, 4294901760
        %v718 = vsub.f32 %v246, %v717
        %v719 = vand.u32 %v718, 4294901760
        %720 = vmatpush1.msra.mxu0 %v719
        %721 = vmatprep.subr.mxu0 0.0
        %v722 = vand.u32 %v247, 4294901760
        %v723 = vsub.f32 %v247, %v722
        %v724 = vand.u32 %v723, 4294901760
        %725 = vmatpush1.msra.mxu0 %v724
        %726 = vmatprep.subr.mxu0 0.0
        %v727 = vand.u32 %v256, 4294901760
        %v728 = vsub.f32 %v256, %v727
        %v729 = vand.u32 %v728, 4294901760
        %730 = vmatpush1.msra.mxu0 %v729
        %731 = vmatprep.subr.mxu0 0.0
        %732 = vmatpush1.msra.mxu0 0.0
        %733 = vmatprep.subr.mxu0 0.0
        %734 = vmatpush1.msra.mxu0 0.0
        %735 = vmatprep.subr.mxu0 0.0
        %736 = vmatpush1.msra.mxu0 0.0
        %737 = vmatprep.subr.mxu0 0.0
        %738 = vmatpush1.msra.mxu0 0.0
        %739 = vmatprep.subr.mxu0 0.0
        %740 = vmatpush1.msra.mxu0 0.0
        %741 = vmatprep.subr.mxu0 0.0
        %742 = vmatpush1.msra.mxu0 0.0
        %743 = vmatprep.subr.mxu0 0.0
        %744 = vmatpush1.msra.mxu0 0.0
        %745 = vmatprep.subr.mxu0 0.0
        %746 = vmatpush1.msra.mxu0 0.0
        %747 = vmatprep.subr.mxu0 0.0
        %748 = vmatpush1.msra.mxu0 0.0
        %749 = vmatprep.subr.mxu0 0.0
        %750 = vmatpush1.msra.mxu0 0.0
        %751 = vmatprep.subr.mxu0 0.0
        %752 = vmatpush1.msra.mxu0 0.0
        %753 = vmatprep.subr.mxu0 0.0
        %754 = vmatpush1.msra.mxu0 0.0
        %755 = vmatprep.subr.mxu0 0.0
        %756 = vmatpush1.msra.mxu0 0.0
        %757 = vmatprep.subr.mxu0 0.0
        %758 = vmatpush1.msra.mxu0 0.0
        %759 = vmatprep.subr.mxu0 0.0
        %760 = vmatpush1.msra.mxu0 0.0
        %761 = vmatprep.subr.mxu0 0.0
        %762 = vmatpush1.msra.mxu0 0.0
        %763 = vmatprep.subr.mxu0 0.0
        %764 = vmatpush1.msra.mxu0 0.0
        %765 = vmatprep.subr.mxu0 0.0
        %766 = vmatpush1.msra.mxu0 0.0
        %767 = vmatprep.subr.mxu0 0.0
        %768 = vmatpush1.msra.mxu0 0.0
        %769 = vmatprep.mubr.f32.mxu0 0.0
        %v770 = vand.u32 %v252, 4294901760
        %771 = vmatmul.mubr.f32.gmra.mrb[0].mxu0 %v770
        %v772 = vpop.f32.mrb[0].mxu0
        %v773 = vadd.f32 %v663, %v772
        %v774 = vpop.f32.mrb[0].mxu0
        %775 = vdwg.mxu0
        %776 = vmatprep.subr.mxu0 0.0
        %v777 = vand.u32 %v236, 4294901760
        %778 = vmatpush1.msra.mxu0 %v777
        %779 = vmatprep.subr.mxu0 0.0
        %v780 = vand.u32 %v237, 4294901760
        %781 = vmatpush1.msra.mxu0 %v780
        %782 = vmatprep.subr.mxu0 0.0
        %v783 = vand.u32 %v238, 4294901760
        %784 = vmatpush1.msra.mxu0 %v783
        %785 = vmatprep.subr.mxu0 0.0
        %v786 = vand.u32 %v239, 4294901760
        %787 = vmatpush1.msra.mxu0 %v786
        %788 = vmatprep.subr.mxu0 0.0
        %v789 = vand.u32 %v240, 4294901760
        %790 = vmatpush1.msra.mxu0 %v789
        %791 = vmatprep.subr.mxu0 0.0
        %v792 = vand.u32 %v241, 4294901760
        %793 = vmatpush1.msra.mxu0 %v792
        %794 = vmatprep.subr.mxu0 0.0
        %v795 = vand.u32 %v242, 4294901760
        %796 = vmatpush1.msra.mxu0 %v795
        %797 = vmatprep.subr.mxu0 0.0
        %v798 = vand.u32 %v243, 4294901760
        %799 = vmatpush1.msra.mxu0 %v798
        %800 = vmatprep.subr.mxu0 0.0
        %v801 = vand.u32 %v244, 4294901760
        %802 = vmatpush1.msra.mxu0 %v801
        %803 = vmatprep.subr.mxu0 0.0
        %v804 = vand.u32 %v245, 4294901760
        %805 = vmatpush1.msra.mxu0 %v804
        %806 = vmatprep.subr.mxu0 0.0
        %v807 = vand.u32 %v246, 4294901760
        %808 = vmatpush1.msra.mxu0 %v807
        %809 = vmatprep.subr.mxu0 0.0
        %v810 = vand.u32 %v247, 4294901760
        %811 = vmatpush1.msra.mxu0 %v810
        %812 = vmatprep.subr.mxu0 0.0
        %v813 = vand.u32 %v256, 4294901760
        %814 = vmatpush1.msra.mxu0 %v813
        %815 = vmatprep.subr.mxu0 0.0
        %816 = vmatpush1.msra.mxu0 0.0
        %817 = vmatprep.subr.mxu0 0.0
        %818 = vmatpush1.msra.mxu0 0.0
        %819 = vmatprep.subr.mxu0 0.0
        %820 = vmatpush1.msra.mxu0 0.0
        %821 = vmatprep.subr.mxu0 0.0
        %822 = vmatpush1.msra.mxu0 0.0
        %823 = vmatprep.subr.mxu0 0.0
        %824 = vmatpush1.msra.mxu0 0.0
        %825 = vmatprep.subr.mxu0 0.0
        %826 = vmatpush1.msra.mxu0 0.0
        %827 = vmatprep.subr.mxu0 0.0
        %828 = vmatpush1.msra.mxu0 0.0
        %829 = vmatprep.subr.mxu0 0.0
        %830 = vmatpush1.msra.mxu0 0.0
        %831 = vmatprep.subr.mxu0 0.0
        %832 = vmatpush1.msra.mxu0 0.0
        %833 = vmatprep.subr.mxu0 0.0
        %834 = vmatpush1.msra.mxu0 0.0
        %835 = vmatprep.subr.mxu0 0.0
        %836 = vmatpush1.msra.mxu0 0.0
        %837 = vmatprep.subr.mxu0 0.0
        %838 = vmatpush1.msra.mxu0 0.0
        %839 = vmatprep.subr.mxu0 0.0
        %840 = vmatpush1.msra.mxu0 0.0
        %841 = vmatprep.subr.mxu0 0.0
        %842 = vmatpush1.msra.mxu0 0.0
        %843 = vmatprep.subr.mxu0 0.0
        %844 = vmatpush1.msra.mxu0 0.0
        %845 = vmatprep.subr.mxu0 0.0
        %846 = vmatpush1.msra.mxu0 0.0
        %847 = vmatprep.subr.mxu0 0.0
        %848 = vmatpush1.msra.mxu0 0.0
        %849 = vmatprep.subr.mxu0 0.0
        %850 = vmatpush1.msra.mxu0 0.0
        %851 = vmatprep.subr.mxu0 0.0
        %852 = vmatpush1.msra.mxu0 0.0
        %853 = vmatprep.mubr.f32.mxu0 0.0
        %v854 = vand.u32 %v252, 4294901760
        %855 = vmatmul.mubr.f32.gmra.mrb[0].mxu0 %v854
        %v856 = vpop.f32.mrb[0].mxu0
        %v857 = vadd.f32 %v773, %v856
        %v858 = vpop.f32.mrb[0].mxu0
        %859 = vdwg.mxu0
        %860 = vst [vmem:[%s215] sm:$0xff] %v857
        %s861 = sand.u32 %s116, 1
        %s862 = scalar_lea.sflag [#allocation4], %s861
        %s863 = sand.u32 %s116, 1
        %s864 = smul.addr %s863, 8
        %s865 = scalar_lea.vmem [#allocation7], %s864
        // Predicated region
        $region41: #{tpu_custom_call.1} parent=31 // pred_check
          %p866 = pneg %p126
        $region42: #{tpu_custom_call.1} parent=31 // pred_check_branch
          %868 = sbr.rel (%p866) target = $region44
        $region43: #{tpu_custom_call.1} parent=31 // pred_region
          %s869 = sadd.s32 %s24, %s23
          %s871 = ssub.s32 128, 128
          %872 = vsyncadd %s862, %s871
          %s873 = smul.addr %s869, 128
          %s874 = scalar_lea.hbm %s3, %s873
          %s876 = sshll.u32 %s865, 4
          %s877 = int_to_ptr.vmem [resolvable:$true] %s876
          %879 = dma.vmem_to_hbm [thread:$0]  %s877, 128, %s874, %s862
        $region44: #{tpu_custom_call.1} parent=31 // pred_fallthru
          _
      $region32: #{tpu_custom_call.1} parent=5 // pred_fallthru
        _
      %p880 = scmp.le.s32.totalorder 2, %s14
      // Predicated region
      $region45: #{tpu_custom_call.1} parent=5 // pred_check
        %p881 = pneg %p880
      $region46: #{tpu_custom_call.1} parent=5 // pred_check_branch
        %883 = sbr.rel (%p881) target = $region48
      $region47: #{tpu_custom_call.1} parent=5 // pred_region
        %s884 = ssub.s32 %s14, 2
        // Predicated region
        $region49: #{tpu_custom_call.1} parent=47 // pred_check
          %p885 = pneg %p132
        $region50: #{tpu_custom_call.1} parent=47 // pred_check_branch
          %887 = sbr.rel (%p885) target = $region52
        $region51: #{tpu_custom_call.1} parent=47 // pred_region
          %s888 = sand.u32 %s117, 1
          %s889 = scalar_lea.sflag [#allocation4], %s888
          %s890 = sand.u32 %s117, 1
          %s891 = smul.addr %s890, 8
          %s892 = scalar_lea.vmem [#allocation7], %s891
          %893 = dma.done %s889, 128
        $region52: #{tpu_custom_call.1} parent=47 // pred_fallthru
          _
      $region48: #{tpu_custom_call.1} parent=5 // pred_fallthru
        _
    $region6: #{tpu_custom_call.1} parent=1 // loop_footer
      %s18 = sadd.s32 1, %s14
    $region7: #{tpu_custom_call.1} parent=1 // loop_footer_branch
      %13 = sbr.rel target = $region3
    $region8: #{tpu_custom_call.1} parent=1 // loop_exit
      _
    %894 = vsyncpa [#allocation3], 1
    %s895 = scalar_lea.sflag [#allocation3], 1
    %896 = vsyncpa %s895, 1
    %897 = vsyncpa [#allocation6], 1
    %898 = vsyncpa [#allocation4], 1
    %s899 = scalar_lea.sflag [#allocation4], 1
    %900 = vsyncpa %s899, 1

</llo_original>
